<compile_context>
chip_gen: v7x
topology: tpu7x:2x2x1
jax: 0.10.0
libtpu: 0.0.40
codegen_flags: <defaults>
</compile_context>

<pallas_src>
import functools

import jax
import jax.numpy as jnp
from jax.experimental import pallas as pl
from jax.experimental.pallas import tpu as pltpu

LANES = 128
MAX_TILE_ROWS = 8192   # 8192 * 128 * 4 B = 4 MiB per f32 input block


def _bce_kernel(params_ref, pred_ref, true_ref, out_ref, *,
                rows, tile_rows, num_tiles, steps_per_split):
    c = pl.program_id(0)              # split (TensorCore) index — "parallel"
    j = pl.program_id(1)              # reduction step within split — "arbitrary"
    b = c * steps_per_split + j       # intended (unclamped) tile index

    @pl.when(j == 0)
    def _():
        out_ref[...] = jnp.zeros_like(out_ref)

    pos = params_ref[0]
    eps = params_ref[1]

    p = pred_ref[...].astype(jnp.float32)
    t = true_ref[...].astype(jnp.float32)

    # torch.clamp(pred, min=eps, max=1 - eps)
    p = jnp.clip(p, eps, 1.0 - eps)

    # TODO(synk): with guaranteed-binary targets this could use a single log
    # per element; PyTorch BCELoss allows fractional targets, so keep both.
    term = pos * t * jnp.log(p) + (1.0 - t) * jnp.log(1.0 - p)

    # Interior tiles are fully valid: accumulate unmasked (saves the iota /
    # compare / select VALU work on every element; matters most on v7x).
    @pl.when(b < num_tiles - 1)
    def _():
        out_ref[...] += jnp.sum(term, axis=0, keepdims=True)[None]

    # Last (possibly partial) tile and phantom steps: the overhang region of a
    # partial block holds unspecified VMEM data — jnp.where discards it
    # (NaN/Inf-safe). Phantom steps (b >= num_tiles; their DMA is clamped onto
    # the last real tile by the index_map) get an all-false mask -> exactly 0.
    @pl.when(b >= num_tiles - 1)
    def _():
        row = jax.lax.broadcasted_iota(jnp.int32, term.shape, 0) + b * tile_rows
        masked = jnp.where(row < rows, term, 0.0)
        out_ref[...] += jnp.sum(masked, axis=0, keepdims=True)[None]


def bce_loss(pred, true, pos=1.0, eps=1e-6, max_tile_rows=MAX_TILE_ROWS):
    """Weighted BCE loss (matches qunet BCELoss.forward). `pred` holds probs."""
    assert pred.shape == true.shape
    assert pos > 0, f'weight of positive class should be positive, but got {pos}'
    n = int(pred.size)

    pred_f = pred.reshape(-1)   # free (bitcast) for contiguous inputs
    true_f = true.reshape(-1)

    # Lane-aligned prefix goes through the kernel; <128-element tail is a tiny
    # jnp expression. No full-size pad/copy of the inputs for aligned sizes.
    n_main = (n // LANES) * LANES
    tail = n - n_main

    pos_f = jnp.float32(pos)
    eps_f = jnp.float32(eps)
    total = jnp.float32(0.0)

    if n_main > 0:
        if tail:
            # TODO(synk): XLA may materialize these prefix slices as copies; a
            # fully zero-copy ragged path would DMA the tail from a side buffer.
            pred_main = pred_f[:n_main]
            true_main = true_f[:n_main]
        else:
            pred_main, true_main = pred_f, true_f

        rows = n_main // LANES
        pred_2d = pred_main.reshape(rows, LANES)
        true_2d = true_main.reshape(rows, LANES)

        tile_rows = min(max_tile_rows, rows)          # multiple of 8/16 or full dim
        num_tiles = (rows + tile_rows - 1) // tile_rows
        # v7x: split the reduction across both TensorCores via a "parallel"
        # leading axis; on v5e/v6e the two splits just run back-to-back.
        num_splits = 2 if num_tiles >= 2 else 1
        steps_per_split = (num_tiles + num_splits - 1) // num_splits

        def data_map(c, j):
            # Clamp phantom steps (only when num_tiles is odd) onto the last
            # real tile; they are masked to zero in the kernel, and the
            # repeated block index means no redundant DMA is issued.
            return (jnp.minimum(c * steps_per_split + j, num_tiles - 1), 0)

        tile_spec = pl.BlockSpec((tile_rows, LANES), data_map)

        kernel = functools.partial(
            _bce_kernel, rows=rows, tile_rows=tile_rows,
            num_tiles=num_tiles, steps_per_split=steps_per_split)

        params = jnp.stack([pos_f, eps_f])            # runtime scalars -> SMEM

        partials = pl.pallas_call(
            kernel,
            out_shape=jax.ShapeDtypeStruct((num_splits, 1, LANES), jnp.float32),
            grid_spec=pltpu.PrefetchScalarGridSpec(
                num_scalar_prefetch=0,
                grid=(num_splits, steps_per_split),
                in_specs=[
                    pl.BlockSpec(memory_space=pltpu.MemorySpace.SMEM),
                    tile_spec,
                    tile_spec,
                ],
                out_specs=pl.BlockSpec((1, 1, LANES), lambda c, j: (c, 0, 0)),
            ),
            compiler_params=pltpu.CompilerParams(
                dimension_semantics=("parallel", "arbitrary"),
                # ~16 MiB actually used (2 inputs x 2 buffers x 4 MiB);
                # 48 MiB leaves headroom yet stays under v7x's 64 MiB/TC.
                vmem_limit_bytes=48 * 1024 * 1024,
            ),
        )(params, pred_2d, true_2d)

        # TODO(synk): for n in the billions a hierarchical reduction would
        # bound f32 rounding error; single-level lane accumulation here.
        total = total + jnp.sum(partials)

    if tail:
        pt = jnp.clip(pred_f[n_main:].astype(jnp.float32), eps_f, 1.0 - eps_f)
        tt = true_f[n_main:].astype(jnp.float32)
        total = total + jnp.sum(pos_f * tt * jnp.log(pt)
                                + (1.0 - tt) * jnp.log(1.0 - pt))

    return -(total / jnp.float32(n)) / (1.0 + pos_f)


def bce_loss_ref(pred, true, pos=1.0, eps=1e-6):
    p = jnp.clip(pred.reshape(-1).astype(jnp.float32), eps, 1.0 - eps)
    t = true.reshape(-1).astype(jnp.float32)
    loss = -jnp.mean(pos * t * jnp.log(p) + (1.0 - t) * jnp.log(1.0 - p))
    return loss / (1.0 + pos)


if __name__ == "__main__":
    key = jax.random.PRNGKey(0)
    ks = jax.random.split(key, 6)
    pos = 1.0  # weight of positive class (module __init__ default)

    def check(pred, true, **kw):
        loss = bce_loss(pred, true, pos=pos, **kw)
        jax.block_until_ready(loss)
        ref = bce_loss_ref(pred, true, pos=pos)
        assert jnp.allclose(loss, ref, rtol=1e-5, atol=1e-6), (loss, ref, pred.shape)

    # 1) Small NCHW predictions/targets, lane-aligned (single-tile path).
    shape = (2, 4, 16, 16)
    pred = jax.random.uniform(ks[0], shape, dtype=jnp.float32)
    true = (jax.random.uniform(ks[1], shape) > 0.5).astype(jnp.float32)
    check(pred, true)

    # 2) Ragged element count (exercises the <128-element jnp tail path).
    shape2 = (2, 3, 7, 5)
    pred2 = jax.random.uniform(ks[2], shape2, dtype=jnp.float32)
    true2 = (jax.random.uniform(ks[3], shape2) > 0.5).astype(jnp.float32)
    check(pred2, true2)

    # 3) Multi-tile / two-split / partial-last-tile / phantom-step paths,
    #    exercised at a small size by shrinking the tile (18 rows, 8-row tiles).
    shape3 = (2, 4, 12, 24)
    pred3 = jax.random.uniform(ks[4], shape3, dtype=jnp.float32)
    true3 = (jax.random.uniform(ks[5], shape3) > 0.5).astype(jnp.float32)
    check(pred3, true3, max_tile_rows=8)

    print("KERNEL_OK")
</pallas_src>

<mosaic_0001>
module attributes {stable_mosaic.version = 11 : i64} {
  func.func @_bce_kernel(%arg0: i32, %arg1: i32, %arg2: memref<2xf32, #tpu.memory_space<smem>>, %arg3: memref<16x128xf32, #tpu.memory_space<vmem>>, %arg4: memref<16x128xf32, #tpu.memory_space<vmem>>, %arg5: memref<1x1x128xf32, #tpu.memory_space<vmem>>) attributes {dimension_semantics = [#tpu.dimension_semantics<parallel>, #tpu.dimension_semantics<arbitrary>], iteration_bounds = array<i64: 1, 1>, scalar_prefetch = 0 : i64, scratch_operands = 0 : i64, tpu.core_type = #tpu.core_type<tc>, window_params = [{transform_indices = @transform_0, window_bounds = array<i64: 2>}, {transform_indices = @transform_1, window_bounds = array<i64: 16, 128>}, {transform_indices = @transform_2, window_bounds = array<i64: 16, 128>}, {transform_indices = @transform_3, window_bounds = array<i64: 1, 1, 128>}]} {
    %c1_i32 = arith.constant 1 : i32
    %0 = arith.muli %arg0, %c1_i32 : i32
    %1 = arith.addi %0, %arg1 : i32
    %c0_i32 = arith.constant 0 : i32
    %2 = arith.cmpi eq, %arg1, %c0_i32 : i32
    %3 = arith.extui %2 : i1 to i32
    %c0_i32_0 = arith.constant 0 : i32
    %4 = arith.cmpi ne, %3, %c0_i32_0 : i32
    scf.if %4 {
      %cst_11 = arith.constant 0.000000e+00 : f32
      %31 = vector.broadcast %cst_11 : f32 to vector<1x1x128xf32>
      %c0_12 = arith.constant 0 : index
      %c0_13 = arith.constant 0 : index
      %c0_14 = arith.constant 0 : index
      %32 = vector.load %arg5[%c0_12, %c0_13, %c0_14] : memref<1x1x128xf32, #tpu.memory_space<vmem>>, vector<1x1x128xf32>
      tpu.vector_store %arg5[%c0_12, %c0_13, %c0_14], %31 {strides = array<i32>} : memref<1x1x128xf32, #tpu.memory_space<vmem>>, vector<1x1x128xf32>,
    } else {
    }
    %c0 = arith.constant 0 : index
    %5 = memref.load %arg2[%c0] : memref<2xf32, #tpu.memory_space<smem>>
    %c1 = arith.constant 1 : index
    %6 = memref.load %arg2[%c1] : memref<2xf32, #tpu.memory_space<smem>>
    %c0_1 = arith.constant 0 : index
    %c0_2 = arith.constant 0 : index
    %7 = vector.load %arg3[%c0_1, %c0_2] : memref<16x128xf32, #tpu.memory_space<vmem>>, vector<16x128xf32>
    %c0_3 = arith.constant 0 : index
    %c0_4 = arith.constant 0 : index
    %8 = vector.load %arg4[%c0_3, %c0_4] : memref<16x128xf32, #tpu.memory_space<vmem>>, vector<16x128xf32>
    %cst = arith.constant 1.000000e+00 : f32
    %9 = arith.subf %cst, %6 : f32
    %10 = vector.broadcast %6 : f32 to vector<16x128xf32>
    %11 = arith.maximumf %10, %7 : vector<16x128xf32>
    %12 = vector.broadcast %9 : f32 to vector<16x128xf32>
    %13 = arith.minimumf %12, %11 : vector<16x128xf32>
    %14 = vector.broadcast %5 : f32 to vector<16x128xf32>
    %15 = arith.mulf %14, %8 : vector<16x128xf32>
    %16 = math.log %13 : vector<16x128xf32>
    %17 = arith.mulf %15, %16 : vector<16x128xf32>
    %cst_5 = arith.constant 1.000000e+00 : f32
    %18 = vector.broadcast %cst_5 : f32 to vector<16x128xf32>
    %19 = arith.subf %18, %8 : vector<16x128xf32>
    %cst_6 = arith.constant 1.000000e+00 : f32
    %20 = vector.broadcast %cst_6 : f32 to vector<16x128xf32>
    %21 = arith.subf %20, %13 : vector<16x128xf32>
    %22 = math.log %21 : vector<16x128xf32>
    %23 = arith.mulf %19, %22 : vector<16x128xf32>
    %24 = arith.addf %17, %23 : vector<16x128xf32>
    %c0_i32_7 = arith.constant 0 : i32
    %25 = arith.cmpi slt, %1, %c0_i32_7 : i32
    %26 = arith.extui %25 : i1 to i32
    %c0_i32_8 = arith.constant 0 : i32
    %27 = arith.cmpi ne, %26, %c0_i32_8 : i32
    scf.if %27 {
      %c0_11 = arith.constant 0 : index
      %c0_12 = arith.constant 0 : index
      %c0_13 = arith.constant 0 : index
      %31 = vector.load %arg5[%c0_11, %c0_12, %c0_13] : memref<1x1x128xf32, #tpu.memory_space<vmem>>, vector<1x1x128xf32>
      %cst_14 = arith.constant dense<0.000000e+00> : vector<128xf32>
      %32 = vector.multi_reduction <add>, %24, %cst_14 [0] : vector<16x128xf32> to vector<128xf32>
      %33 = vector.shape_cast %32 : vector<128xf32> to vector<1x128xf32>
      %34 = vector.shape_cast %33 : vector<1x128xf32> to vector<1x1x128xf32>
      %35 = arith.addf %31, %34 : vector<1x1x128xf32>
      %c0_15 = arith.constant 0 : index
      %c0_16 = arith.constant 0 : index
      %c0_17 = arith.constant 0 : index
      %36 = vector.load %arg5[%c0_15, %c0_16, %c0_17] : memref<1x1x128xf32, #tpu.memory_space<vmem>>, vector<1x1x128xf32>
      tpu.vector_store %arg5[%c0_15, %c0_16, %c0_17], %35 {strides = array<i32>} : memref<1x1x128xf32, #tpu.memory_space<vmem>>, vector<1x1x128xf32>,
    } else {
    }
    %c0_i32_9 = arith.constant 0 : i32
    %28 = arith.cmpi sge, %1, %c0_i32_9 : i32
    %29 = arith.extui %28 : i1 to i32
    %c0_i32_10 = arith.constant 0 : i32
    %30 = arith.cmpi ne, %29, %c0_i32_10 : i32
    scf.if %30 {
      %31 = tpu.iota {dimensions = array<i32: 0>} : vector<16x128xi32>
      %c16_i32 = arith.constant 16 : i32
      %32 = arith.muli %1, %c16_i32 : i32
      %33 = vector.broadcast %32 : i32 to vector<16x128xi32>
      %34 = arith.addi %31, %33 : vector<16x128xi32>
      %c16_i32_11 = arith.constant 16 : i32
      %35 = vector.broadcast %c16_i32_11 : i32 to vector<16x128xi32>
      %36 = arith.cmpi slt, %34, %35 : vector<16x128xi32>
      %cst_12 = arith.constant 0.000000e+00 : f32
      %37 = vector.broadcast %cst_12 : f32 to vector<16x128xf32>
      %38 = arith.select %36, %24, %37 : vector<16x128xi1>, vector<16x128xf32>
      %c0_13 = arith.constant 0 : index
      %c0_14 = arith.constant 0 : index
      %c0_15 = arith.constant 0 : index
      %39 = vector.load %arg5[%c0_13, %c0_14, %c0_15] : memref<1x1x128xf32, #tpu.memory_space<vmem>>, vector<1x1x128xf32>
      %cst_16 = arith.constant dense<0.000000e+00> : vector<128xf32>
      %40 = vector.multi_reduction <add>, %38, %cst_16 [0] : vector<16x128xf32> to vector<128xf32>
      %41 = vector.shape_cast %40 : vector<128xf32> to vector<1x128xf32>
      %42 = vector.shape_cast %41 : vector<1x128xf32> to vector<1x1x128xf32>
      %43 = arith.addf %39, %42 : vector<1x1x128xf32>
      %c0_17 = arith.constant 0 : index
      %c0_18 = arith.constant 0 : index
      %c0_19 = arith.constant 0 : index
      %44 = vector.load %arg5[%c0_17, %c0_18, %c0_19] : memref<1x1x128xf32, #tpu.memory_space<vmem>>, vector<1x1x128xf32>
      tpu.vector_store %arg5[%c0_17, %c0_18, %c0_19], %43 {strides = array<i32>} : memref<1x1x128xf32, #tpu.memory_space<vmem>>, vector<1x1x128xf32>,
    } else {
    }
    return
  }
  func.func @transform_0(%arg0: i32, %arg1: i32) -> i32 {
    %c0_i32 = arith.constant 0 : i32
    %c0_i32_0 = arith.constant 0 : i32
    return %c0_i32 : i32
  }
  func.func @transform_1(%arg0: i32, %arg1: i32) -> (i32, i32) {
    %c1_i32 = arith.constant 1 : i32
    %0 = arith.muli %arg0, %c1_i32 : i32
    %1 = arith.addi %0, %arg1 : i32
    %c0_i32 = arith.constant 0 : i32
    %2 = arith.minsi %1, %c0_i32 : i32
    %c0_i32_0 = arith.constant 0 : i32
    %c0_i32_1 = arith.constant 0 : i32
    return %2, %c0_i32_0 : i32, i32
  }
  func.func @transform_2(%arg0: i32, %arg1: i32) -> (i32, i32) {
    %c1_i32 = arith.constant 1 : i32
    %0 = arith.muli %arg0, %c1_i32 : i32
    %1 = arith.addi %0, %arg1 : i32
    %c0_i32 = arith.constant 0 : i32
    %2 = arith.minsi %1, %c0_i32 : i32
    %c0_i32_0 = arith.constant 0 : i32
    %c0_i32_1 = arith.constant 0 : i32
    return %2, %c0_i32_0 : i32, i32
  }
  func.func @transform_3(%arg0: i32, %arg1: i32) -> (i32, i32, i32) {
    %c0_i32 = arith.constant 0 : i32
    %c0_i32_0 = arith.constant 0 : i32
    %c0_i32_1 = arith.constant 0 : i32
    return %arg0, %c0_i32, %c0_i32_0 : i32, i32, i32
  }
}

</mosaic_0001>

<llo_original>
// kernel: tpu_custom_call.1
$region0: #{tpu_custom_call.1}
  #allocation0 [shape = 'u32[]', space=smem, size = 0x4, offset = 0x4, fixed_abs, tag = 'smem constant byte address 0x4 - core index']
  #allocation1 [shape = 'u32[144,128]{1,0:T(1,128)}', space=vmem, size = 0x12000, scoped, tag = 'internal scratch']
  %s0 = inlined_call_operand.hbm [shape: f32[2], index: 0, kind: input, shape index: {}]
  %s1 = inlined_call_operand.hbm [shape: f32[16,128], index: 1, kind: input, shape index: {}]
  %s2 = inlined_call_operand.hbm [shape: f32[16,128], index: 2, kind: input, shape index: {}]
  %s3 = inlined_call_operand.hbm [shape: f32[1,1,128], index: 3, kind: output, shape index: {}]
  %s4 = sld [smem:[#allocation0]]
  $region46: #{tpu_custom_call.1} parent=0
    _
  %s6 = ssub.s32 1, %s4
  %s7 = scalar_select 0, %s6, %s4
  $region1: #{tpu_custom_call.1} parent=0
    #allocation2 [shape = 'u8[512]{0}', space=smem, size = 0x200, scoped, tag = 'input window, operand 0, single buffered']
    #allocation3 [shape = 's32[1]{0}', space=sflag, size = 0x4, scoped, tag = 'scoped memory for tpu_custom_call.1']
    #allocation4 [shape = 's32[1]{0}', space=sflag, size = 0x4, scoped, tag = 'scoped memory for tpu_custom_call.1']
    #allocation5 [shape = 's32[1]{0}', space=sflag, size = 0x4, scoped, tag = 'scoped memory for tpu_custom_call.1']
    #allocation6 [shape = 'u8[8192]{0}', space=vmem, size = 0x2000, scoped, tag = 'input window, operand 1, single buffered']
    #allocation7 [shape = 'u8[8192]{0}', space=vmem, size = 0x2000, scoped, tag = 'input window, operand 2, single buffered']
    #allocation8 [shape = 's32[1]{0}', space=sflag, size = 0x4, scoped, tag = 'scoped memory for tpu_custom_call.1']
    #allocation9 [shape = 'u8[512]{0}', space=vmem, size = 0x400, scoped, tag = 'output window, operand 0, single buffered']
    %8 = vsyncpa [#allocation5], 0
    %9 = vsyncpa [#allocation3], 0
    %10 = vsyncpa [#allocation8], 0
    %11 = vsyncpa [#allocation4], 0
    // Predicated region
    $region2: #{tpu_custom_call.1} parent=1 // pred_check
      _
    $region3: #{tpu_custom_call.1} parent=1 // pred_check_branch
      %13 = sbr.rel (0) target = $region5
    $region4: #{tpu_custom_call.1} parent=1 // pred_region
      %s15 = ssub.s32 16, 16
      %16 = vsyncadd [#allocation5], %s15
      %19 = dma.hbm_to_smem %s0, 16, [#allocation2], [#allocation5]
    $region5: #{tpu_custom_call.1} parent=1 // pred_fallthru
      _
    // Predicated region
    $region6: #{tpu_custom_call.1} parent=1 // pred_check
      _
    $region7: #{tpu_custom_call.1} parent=1 // pred_check_branch
      %21 = sbr.rel (0) target = $region9
    $region8: #{tpu_custom_call.1} parent=1 // pred_region
      %s22 = sadd.s32 0, 0
      %p23 = scmp.lt.s32.totalorder %s22, 0
      %s24 = scalar_select %p23, %s22, 0
      %s25 = smul.u32 2, %s24
      %s27 = ssub.s32 256, 256
      %28 = vsyncadd [#allocation3], %s27
      %s29 = smul.addr %s25, 128
      %s30 = scalar_lea.hbm %s1, %s29
      %s31 = sshll.u32 [#allocation6], 4
      %s32 = int_to_ptr.vmem [resolvable:$true] %s31
      %37 = dma.hbm_to_vmem [thread:$0]  %s30, 256, %s32, [#allocation3], 128, 128, 8
    $region9: #{tpu_custom_call.1} parent=1 // pred_fallthru
      _
    // Predicated region
    $region10: #{tpu_custom_call.1} parent=1 // pred_check
      _
    $region11: #{tpu_custom_call.1} parent=1 // pred_check_branch
      %39 = sbr.rel (0) target = $region13
    $region12: #{tpu_custom_call.1} parent=1 // pred_region
      %s40 = sadd.s32 0, 0
      %p41 = scmp.lt.s32.totalorder %s40, 0
      %s42 = scalar_select %p41, %s40, 0
      %s43 = smul.u32 2, %s42
      %s45 = ssub.s32 256, 256
      %46 = vsyncadd [#allocation8], %s45
      %s47 = smul.addr %s43, 128
      %s48 = scalar_lea.hbm %s2, %s47
      %s49 = sshll.u32 [#allocation7], 4
      %s50 = int_to_ptr.vmem [resolvable:$true] %s49
      %55 = dma.hbm_to_vmem [thread:$0]  %s48, 256, %s50, [#allocation8], 128, 128, 8
    $region13: #{tpu_custom_call.1} parent=1 // pred_fallthru
      _
    // Predicated region
    $region14: #{tpu_custom_call.1} parent=1 // pred_check
      _
    $region15: #{tpu_custom_call.1} parent=1 // pred_check_branch
      %57 = sbr.rel (0) target = $region17
    $region16: #{tpu_custom_call.1} parent=1 // pred_region
      %58 = dma.done [#allocation5], 16
    $region17: #{tpu_custom_call.1} parent=1 // pred_fallthru
      _
    // Predicated region
    $region18: #{tpu_custom_call.1} parent=1 // pred_check
      _
    $region19: #{tpu_custom_call.1} parent=1 // pred_check_branch
      %60 = sbr.rel (0) target = $region21
    $region20: #{tpu_custom_call.1} parent=1 // pred_region
      %61 = dma.done [#allocation3], 256
    $region21: #{tpu_custom_call.1} parent=1 // pred_fallthru
      _
    // Predicated region
    $region22: #{tpu_custom_call.1} parent=1 // pred_check
      _
    $region23: #{tpu_custom_call.1} parent=1 // pred_check_branch
      %63 = sbr.rel (0) target = $region25
    $region24: #{tpu_custom_call.1} parent=1 // pred_region
      %64 = dma.done [#allocation8], 256
    $region25: #{tpu_custom_call.1} parent=1 // pred_fallthru
      _
    %65 = sfence
    %s66 = sadd.s32 0, 0
    %p67 = scmp.lt.s32.totalorder %s66, 0
    %s68 = scalar_select %p67, %s66, 0
    %s69 = smul.u32 2, %s68
    %s70 = sadd.s32 0, 0
    %p71 = scmp.lt.s32.totalorder %s70, 0
    %s72 = scalar_select %p71, %s70, 0
    %s73 = smul.u32 2, %s72
    %s74 = sadd.s32 0, 0
    %p75 = scmp.eq.s32.totalorder 0, 0
    // Predicated region
    $region26: #{tpu_custom_call.1} parent=1 // pred_check
      %p76 = pneg %p75
    $region27: #{tpu_custom_call.1} parent=1 // pred_check_branch
      %78 = sbr.rel (%p76) target = $region29
    $region28: #{tpu_custom_call.1} parent=1 // pred_region
      %79 = vst [vmem:[#allocation9] sm:$0x1] 0.0
    $region29: #{tpu_custom_call.1} parent=1 // pred_fallthru
      _
    %s80 = sld [smem:[#allocation2]]
    %s81 = sld [smem:[#allocation2 + $0x1]]
    %v82 = vld [vmem:[#allocation6] sm:$0xff]
    %v83 = vld [vmem:[#allocation6 + $0x8] sm:$0xff]
    %v84 = vld [vmem:[#allocation7] sm:$0xff]
    %v85 = vld [vmem:[#allocation7 + $0x8] sm:$0xff]
    %s86 = ssub.f32 1.0, %s81
    %v87 = vstv %s81
    %v88 = vmax.f32 %v87, %v82
    %v89 = vmax.f32 %v87, %v83
    %v90 = vstv %s86
    %v91 = vmin.f32 %v90, %v88
    %v92 = vmin.f32 %v90, %v89
    %v93 = vstv %s80
    %v94 = vmul.f32 %v93, %v84
    %v95 = vmul.f32 %v93, %v85
    %v96 = vlog2.pop %v91
    %v97 = vmul.f32 %v96, 0.6931472
    %v98 = vlog2.pop %v92
    %v99 = vmul.f32 %v98, 0.6931472
    %v100 = vmul.f32 %v94, %v97
    %v101 = vmul.f32 %v95, %v99
    %v102 = vsub.f32 1.0, %v84
    %v103 = vsub.f32 1.0, %v85
    %v104 = vsub.f32 1.0, %v91
    %v105 = vsub.f32 1.0, %v92
    %v106 = vlog2.pop %v104
    %v107 = vmul.f32 %v106, 0.6931472
    %v108 = vlog2.pop %v105
    %v109 = vmul.f32 %v108, 0.6931472
    %v110 = vmul.f32 %v102, %v107
    %v111 = vmul.f32 %v103, %v109
    %v112 = vadd.f32 %v100, %v110
    %v113 = vadd.f32 %v101, %v111
    %p114 = scmp.lt.s32.totalorder %s74, 0
    // Predicated region
    $region30: #{tpu_custom_call.1} parent=1 // pred_check
      %p115 = pneg %p114
    $region31: #{tpu_custom_call.1} parent=1 // pred_check_branch
      %117 = sbr.rel (%p115) target = $region33
    $region32: #{tpu_custom_call.1} parent=1 // pred_region
      %v118 = vld [vmem:[#allocation9] sm:$0x1]
      %v119 = vadd.f32 %v112, %v113
      %v120 = vrot.slane %v119, 4
      %v121 = vadd.f32 %v119, %v120
      %v122 = vrot.slane %v121, 2
      %v123 = vadd.f32 %v121, %v122
      %v124 = vrot.slane %v123, 1
      %v125 = vadd.f32 %v123, %v124
      %v126 = vadd.f32 %v118, %v125
      %127 = vst [vmem:[#allocation9] sm:$0x1] %v126
    $region33: #{tpu_custom_call.1} parent=1 // pred_fallthru
      _
    %p128 = scmp.ge.s32.totalorder %s74, 0
    // Predicated region
    $region34: #{tpu_custom_call.1} parent=1 // pred_check
      %p129 = pneg %p128
    $region35: #{tpu_custom_call.1} parent=1 // pred_check_branch
      %131 = sbr.rel (%p129) target = $region37
    $region36: #{tpu_custom_call.1} parent=1 // pred_region
      %v132 = vlaneseq
      %v133 = vshrl.u32 %v132, 7
      %v134 = vadd.s32 %v133, 8
      %s135 = smul.u32 %s74, 16
      %v136 = vstv %s135
      %v137 = vadd.s32 %v133, %v136
      %v138 = vadd.s32 %v134, %v136
      %vm139 = vcmp.lt.s32.totalorder %v137, 16
      %vm140 = vcmp.lt.s32.totalorder %v138, 16
      %v141 = vsel %vm139, %v112, 0.0
      %v142 = vsel %vm140, %v113, 0.0
      %v143 = vld [vmem:[#allocation9] sm:$0x1]
      %v144 = vadd.f32 %v141, %v142
      %v145 = vrot.slane %v144, 4
      %v146 = vadd.f32 %v144, %v145
      %v147 = vrot.slane %v146, 2
      %v148 = vadd.f32 %v146, %v147
      %v149 = vrot.slane %v148, 1
      %v150 = vadd.f32 %v148, %v149
      %v151 = vadd.f32 %v143, %v150
      %152 = vst [vmem:[#allocation9] sm:$0x1] %v151
    $region37: #{tpu_custom_call.1} parent=1 // pred_fallthru
      _
    // Predicated region
    $region38: #{tpu_custom_call.1} parent=1 // pred_check
      _
    $region39: #{tpu_custom_call.1} parent=1 // pred_check_branch
      %154 = sbr.rel (0) target = $region41
    $region40: #{tpu_custom_call.1} parent=1 // pred_region
      %s156 = ssub.s32 16, 16
      %157 = vsyncadd [#allocation4], %s156
      %s159 = sshll.u32 [#allocation9], 4
      %s160 = int_to_ptr.vmem [resolvable:$true] %s159
      %162 = dma.vmem_to_hbm [thread:$0]  %s160, 16, %s3, [#allocation4]
    $region41: #{tpu_custom_call.1} parent=1 // pred_fallthru
      _
    // Predicated region
    $region42: #{tpu_custom_call.1} parent=1 // pred_check
      _
    $region43: #{tpu_custom_call.1} parent=1 // pred_check_branch
      %164 = sbr.rel (0) target = $region45
    $region44: #{tpu_custom_call.1} parent=1 // pred_region
      %165 = dma.done [#allocation4], 16
    $region45: #{tpu_custom_call.1} parent=1 // pred_fallthru
      _
    %166 = vsyncpa [#allocation3], 1
    %167 = vsyncpa [#allocation8], 1
    %168 = vsyncpa [#allocation4], 1
    %169 = vsyncpa [#allocation5], 1

</llo_original>
